<compile_context>
chip_gen: v5e
topology: v5e:2x2
jax: 0.10.0
libtpu: 0.0.40
codegen_flags: <defaults>
</compile_context>

<pallas_src>
import jax
import jax.numpy as jnp
from jax.experimental import pallas as pl
from jax.experimental.pallas import tpu as pltpu  # noqa: F401  (TPU backend parity)


# ---------------- fused kernel: pack all inputs into one lane-dense slab ----

def _pack_slab_kernel(x_ref, y_ref, z_ref, slab_ref):
    # x_ref: (1, 128)  -> slab rows [0:1)
    # y_ref: (1, 128)  -> slab rows [1:2)   (72 payload lanes + 56 pad)
    # z_ref: (4, 128)  -> slab rows [2:6)   (480 payload elems + 32 pad)
    # All stores are full-128-lane (unmasked) vector stores at static offsets.
    slab_ref[0:1, :] = x_ref[...]
    slab_ref[1:2, :] = y_ref[...]
    slab_ref[2:6, :] = z_ref[...]


# ---------------- wrapper ----------------

def model_forward(x, y, z):
    # --- layout plumbing (wrapper side, fuses in XLA): lane-dense 2D slabs ---
    x_flat = x.reshape(1, 128)                                    # 2*4*16 = 128
    y_flat = jnp.pad(y.reshape(1, 72), ((0, 0), (0, 56)))         # 72 -> 128
    z_flat = jnp.pad(z.reshape(1, 480), ((0, 0), (0, 32)))        # 480 -> 512
    z_flat = z_flat.reshape(4, 128)

    bytes_accessed = (x_flat.size + y_flat.size + z_flat.size) * 4 + 6 * 128 * 4

    slab = pl.pallas_call(
        _pack_slab_kernel,
        out_shape=jax.ShapeDtypeStruct((6, 128), x.dtype),
        cost_estimate=pl.CostEstimate(
            flops=0, transcendentals=0, bytes_accessed=bytes_accessed),
    )(x_flat, y_flat, z_flat)

    # --- carve the 10 split views with static slices/reshapes (pure XLA) ---
    x_rec = slab[0, :].reshape(2, 4, 16)
    y_rec = slab[1, :72].reshape(2, 4, 9)
    z_rec = slab[2:6, :].reshape(512)[:480].reshape(15, 4, 8)

    x0 = x_rec[:, 0:2, :]
    x1 = x_rec[:, 2:4, :]

    y0 = y_rec[:, :, 0:1]
    y1 = y_rec[:, :, 1:4]
    y2 = y_rec[:, :, 4:9]

    z0 = z_rec[0:3]
    z1 = z_rec[3:6]
    z2 = z_rec[6:9]
    z3 = z_rec[9:12]
    z4 = z_rec[12:15]

    return (x0, x1, y0, y1, y2, z0, z1, z2, z3, z4)


if __name__ == "__main__":
    key = jax.random.PRNGKey(0)
    kx, ky, kz = jax.random.split(key, 3)

    # small shapes consistent with the split sizes in the module
    x = jax.random.normal(kx, (2, 4, 16), dtype=jnp.float32)   # split(2, dim=1)
    y = jax.random.normal(ky, (2, 4, 9), dtype=jnp.float32)    # split([1,3,5], dim=2)
    z = jax.random.normal(kz, (15, 4, 8), dtype=jnp.float32)   # split(3, dim=0)

    outs = jax.block_until_ready(model_forward(x, y, z))

    # reference check against plain JAX slicing (== torch.split semantics);
    # pure copies, so use exact equality.
    ref = (
        x[:, 0:2, :], x[:, 2:4, :],
        y[:, :, 0:1], y[:, :, 1:4], y[:, :, 4:9],
        z[0:3], z[3:6], z[6:9], z[9:12], z[12:15],
    )
    for got, exp in zip(outs, ref):
        assert got.shape == exp.shape, (got.shape, exp.shape)
        assert jnp.array_equal(got, exp), "mismatch"

    print("KERNEL_OK")
</pallas_src>

<mosaic_0001>
module attributes {stable_mosaic.version = 11 : i64} {
  func.func @_pack_slab_kernel(%arg0: memref<1x128xf32, #tpu.memory_space<vmem>>, %arg1: memref<1x128xf32, #tpu.memory_space<vmem>>, %arg2: memref<4x128xf32, #tpu.memory_space<vmem>>, %arg3: memref<6x128xf32, #tpu.memory_space<vmem>>) attributes {dimension_semantics = [], scalar_prefetch = 0 : i64, scratch_operands = 0 : i64, tpu.core_type = #tpu.core_type<tc>} {
    %c0 = arith.constant 0 : index
    %c0_0 = arith.constant 0 : index
    %0 = vector.load %arg0[%c0, %c0_0] : memref<1x128xf32, #tpu.memory_space<vmem>>, vector<1x128xf32>
    %c0_1 = arith.constant 0 : index
    %c0_2 = arith.constant 0 : index
    %1 = vector.load %arg3[%c0_1, %c0_2] : memref<6x128xf32, #tpu.memory_space<vmem>>, vector<1x128xf32>
    tpu.vector_store %arg3[%c0_1, %c0_2], %0 {strides = array<i32>} : memref<6x128xf32, #tpu.memory_space<vmem>>, vector<1x128xf32>,
    %c0_3 = arith.constant 0 : index
    %c0_4 = arith.constant 0 : index
    %2 = vector.load %arg1[%c0_3, %c0_4] : memref<1x128xf32, #tpu.memory_space<vmem>>, vector<1x128xf32>
    %c1 = arith.constant 1 : index
    %c0_5 = arith.constant 0 : index
    %3 = vector.load %arg3[%c1, %c0_5] : memref<6x128xf32, #tpu.memory_space<vmem>>, vector<1x128xf32>
    tpu.vector_store %arg3[%c1, %c0_5], %2 {strides = array<i32>} : memref<6x128xf32, #tpu.memory_space<vmem>>, vector<1x128xf32>,
    %c0_6 = arith.constant 0 : index
    %c0_7 = arith.constant 0 : index
    %4 = vector.load %arg2[%c0_6, %c0_7] : memref<4x128xf32, #tpu.memory_space<vmem>>, vector<4x128xf32>
    %c2 = arith.constant 2 : index
    %c0_8 = arith.constant 0 : index
    %5 = vector.load %arg3[%c2, %c0_8] : memref<6x128xf32, #tpu.memory_space<vmem>>, vector<4x128xf32>
    tpu.vector_store %arg3[%c2, %c0_8], %4 {strides = array<i32>} : memref<6x128xf32, #tpu.memory_space<vmem>>, vector<4x128xf32>,
    return
  }
}

</mosaic_0001>

<llo_original>
// kernel: tpu_custom_call.1
$region0: #{tpu_custom_call.1}
  #allocation0 [shape = 'u32[]', space=smem, size = 0x4, offset = 0x4, fixed_abs, tag = 'smem constant byte address 0x4 - core index']
  #allocation1 [shape = 'u32[72,128]{1,0:T(1,128)}', space=vmem, size = 0x9000, scoped, tag = 'internal scratch']
  %s0 = inlined_call_operand.hbm [shape: f32[1,128], index: 0, kind: input, shape index: {}]
  %s1 = inlined_call_operand.hbm [shape: f32[1,128], index: 1, kind: input, shape index: {}]
  %s2 = inlined_call_operand.hbm [shape: f32[4,128], index: 2, kind: input, shape index: {}]
  %s3 = inlined_call_operand.hbm [shape: f32[6,128], index: 3, kind: output, shape index: {}]
  %s4 = sld [smem:[#allocation0]]
  $region34: #{tpu_custom_call.1} parent=0
    _
  %s6 = ssub.s32 1, %s4
  %s7 = scalar_select 0, %s6, %s4
  $region1: #{tpu_custom_call.1} parent=0
    #allocation2 [shape = 'u8[512]{0}', space=vmem, size = 0x400, scoped, tag = 'input window, operand 0, single buffered']
    #allocation3 [shape = 's32[1]{0}', space=sflag, size = 0x4, scoped, tag = 'scoped memory for tpu_custom_call.1']
    #allocation4 [shape = 's32[1]{0}', space=sflag, size = 0x4, scoped, tag = 'scoped memory for tpu_custom_call.1']
    #allocation5 [shape = 'u8[512]{0}', space=vmem, size = 0x400, scoped, tag = 'input window, operand 1, single buffered']
    #allocation6 [shape = 's32[1]{0}', space=sflag, size = 0x4, scoped, tag = 'scoped memory for tpu_custom_call.1']
    #allocation7 [shape = 'u8[2048]{0}', space=vmem, size = 0x800, scoped, tag = 'input window, operand 2, single buffered']
    #allocation8 [shape = 'u8[4096]{0}', space=vmem, size = 0x1000, scoped, tag = 'output window, operand 0, single buffered']
    %8 = vsyncpa [#allocation3], 0
    %9 = vsyncpa [#allocation6], 0
    %10 = vsyncpa [#allocation4], 0
    // Predicated region
    $region2: #{tpu_custom_call.1} parent=1 // pred_check
      _
    $region3: #{tpu_custom_call.1} parent=1 // pred_check_branch
      %12 = sbr.rel (0) target = $region5
    $region4: #{tpu_custom_call.1} parent=1 // pred_region
      %14 = vsyncadd [#allocation3], 0
      %s16 = sshll.u32 %s0, 4
      %s17 = int_to_ptr.hbm [resolvable:$true] %s16
      %s18 = sshll.u32 [#allocation2], 4
      %s19 = int_to_ptr.vmem [resolvable:$true] %s18
      %21 = dma.hbm_to_vmem [thread:$0]  %s17, 16, %s19, [#allocation3]
    $region5: #{tpu_custom_call.1} parent=1 // pred_fallthru
      _
    // Predicated region
    $region6: #{tpu_custom_call.1} parent=1 // pred_check
      _
    $region7: #{tpu_custom_call.1} parent=1 // pred_check_branch
      %23 = sbr.rel (0) target = $region9
    $region8: #{tpu_custom_call.1} parent=1 // pred_region
      %25 = vsyncadd [#allocation6], 0
      %s27 = sshll.u32 %s1, 4
      %s28 = int_to_ptr.hbm [resolvable:$true] %s27
      %s29 = sshll.u32 [#allocation5], 4
      %s30 = int_to_ptr.vmem [resolvable:$true] %s29
      %32 = dma.hbm_to_vmem [thread:$0]  %s28, 16, %s30, [#allocation6]
    $region9: #{tpu_custom_call.1} parent=1 // pred_fallthru
      _
    // Predicated region
    $region10: #{tpu_custom_call.1} parent=1 // pred_check
      _
    $region11: #{tpu_custom_call.1} parent=1 // pred_check_branch
      %34 = sbr.rel (0) target = $region13
    $region12: #{tpu_custom_call.1} parent=1 // pred_region
      %36 = vsyncadd [#allocation6], 0
      %s38 = sshll.u32 %s2, 4
      %s39 = int_to_ptr.hbm [resolvable:$true] %s38
      %s40 = sshll.u32 [#allocation7], 4
      %s41 = int_to_ptr.vmem [resolvable:$true] %s40
      %43 = dma.hbm_to_vmem [thread:$0]  %s39, 64, %s41, [#allocation6]
    $region13: #{tpu_custom_call.1} parent=1 // pred_fallthru
      _
    // Predicated region
    $region14: #{tpu_custom_call.1} parent=1 // pred_check
      _
    $region15: #{tpu_custom_call.1} parent=1 // pred_check_branch
      %45 = sbr.rel (0) target = $region17
    $region16: #{tpu_custom_call.1} parent=1 // pred_region
      %47 = dma.done [#allocation3], 16
    $region17: #{tpu_custom_call.1} parent=1 // pred_fallthru
      _
    // Predicated region
    $region18: #{tpu_custom_call.1} parent=1 // pred_check
      _
    $region19: #{tpu_custom_call.1} parent=1 // pred_check_branch
      %49 = sbr.rel (0) target = $region21
    $region20: #{tpu_custom_call.1} parent=1 // pred_region
      %51 = dma.done [#allocation6], 16
    $region21: #{tpu_custom_call.1} parent=1 // pred_fallthru
      _
    // Predicated region
    $region22: #{tpu_custom_call.1} parent=1 // pred_check
      _
    $region23: #{tpu_custom_call.1} parent=1 // pred_check_branch
      %53 = sbr.rel (0) target = $region25
    $region24: #{tpu_custom_call.1} parent=1 // pred_region
      %55 = dma.done [#allocation6], 64
    $region25: #{tpu_custom_call.1} parent=1 // pred_fallthru
      _
    %v56 = vld [vmem:[#allocation2] sm:$0x1]
    %57 = vst [vmem:[#allocation8] sm:$0x1] %v56
    %v58 = vld [vmem:[#allocation5] sm:$0x1]
    %59 = vst [vmem:[#allocation8 + $0x1] sm:$0x1] %v58
    %v60 = vld [vmem:[#allocation7] sm:$0xf]
    %61 = vst [vmem:[#allocation8 + $0x2] sm:$0xf] %v60
    // Predicated region
    $region26: #{tpu_custom_call.1} parent=1 // pred_check
      _
    $region27: #{tpu_custom_call.1} parent=1 // pred_check_branch
      %63 = sbr.rel (0) target = $region29
    $region28: #{tpu_custom_call.1} parent=1 // pred_region
      %65 = vsyncadd [#allocation4], 0
      %s67 = sshll.u32 [#allocation8], 4
      %s68 = int_to_ptr.vmem [resolvable:$true] %s67
      %s69 = sshll.u32 %s3, 4
      %s70 = int_to_ptr.hbm [resolvable:$true] %s69
      %72 = dma.vmem_to_hbm [thread:$0]  %s68, 128, %s70, [#allocation4]
    $region29: #{tpu_custom_call.1} parent=1 // pred_fallthru
      _
    // Predicated region
    $region30: #{tpu_custom_call.1} parent=1 // pred_check
      _
    $region31: #{tpu_custom_call.1} parent=1 // pred_check_branch
      %74 = sbr.rel (0) target = $region33
    $region32: #{tpu_custom_call.1} parent=1 // pred_region
      %76 = dma.done [#allocation4], 128
    $region33: #{tpu_custom_call.1} parent=1 // pred_fallthru
      _
    %77 = vsyncpa [#allocation3], 1
    %78 = vsyncpa [#allocation6], 1
    %79 = vsyncpa [#allocation4], 1

</llo_original>
